<compile_context>
chip_gen: v6e
topology: v6e:2x2x1
jax: 0.10.0
libtpu: 0.0.40
codegen_flags: <defaults>
</compile_context>

<pallas_src>
import functools
import math

import numpy as np
import jax
import jax.numpy as jnp
from jax import lax
from jax.experimental import pallas as pl
from jax.experimental.pallas import tpu as pltpu


# ------------------------------------------------------------------ helpers --

def _layernorm(y, g, b, eps=1e-5):
    mu = jnp.mean(y, axis=-1, keepdims=True)
    var = jnp.mean(jnp.square(y - mu), axis=-1, keepdims=True)
    return (y - mu) * lax.rsqrt(var + eps) * g + b


def _row_tile(rows, target):
    """Largest row tile <= target (the whole slab if it already fits)."""
    tm = rows if rows <= target else target
    return tm, pl.cdiv(rows, tm)


_PARALLEL1 = pltpu.CompilerParams(dimension_semantics=("parallel",))


# ------------------------------------------------------------------ kernels --

def lateral_kernel(x_ref, w_ref, b_ref, g_ref, beta_ref, o_ref, *, mxu_dtype):
    """Lateral projection: relu(LayerNorm(x @ W + b)) on a (tm, Cin) row tile."""
    y = jnp.dot(x_ref[...].astype(mxu_dtype), w_ref[...].astype(mxu_dtype),
                preferred_element_type=jnp.float32) + b_ref[...]
    y = _layernorm(y, g_ref[...], beta_ref[...])
    o_ref[...] = jnp.maximum(y, 0.0)


def linear_kernel(x_ref, w_ref, b_ref, o_ref, *, mxu_dtype):
    """Plain linear (fused qkv projection) on a (tm, K) row tile."""
    o_ref[...] = jnp.dot(x_ref[...].astype(mxu_dtype), w_ref[...].astype(mxu_dtype),
                         preferred_element_type=jnp.float32) + b_ref[...]


def attn_block_kernel(qkv_ref, res_ref, wo_ref, bo_ref, g_ref, beta_ref, o_ref,
                      acc_ref, *, num_heads, head_dim, kernel_size, mxu_dtype,
                      approx_recip):
    """Fused MHA + output projection + residual + LayerNorm for one batch element.

    All heads are processed inside the block so the output stays lane-dense (T, C)
    and no head-major transpose ever touches HBM.
    """
    T = qkv_ref.shape[0]
    C = num_heads * head_dim
    scale = 1.0 / math.sqrt(head_dim)

    if kernel_size is not None:
        # Local-attention band mask built in-kernel (matches compute_mask: 0 / -1e9).
        half = kernel_size // 2
        ii = lax.broadcasted_iota(jnp.int32, (T, T), 0)
        jj = lax.broadcasted_iota(jnp.int32, (T, T), 1)
        neg = jnp.where((jj >= ii - half) & (jj <= ii + half), 0.0, -1e9)

    for h in range(num_heads):                              # static unroll over heads
        q = qkv_ref[:, h * head_dim:(h + 1) * head_dim].astype(mxu_dtype)
        k = qkv_ref[:, C + h * head_dim:C + (h + 1) * head_dim].astype(mxu_dtype)
        v = qkv_ref[:, 2 * C + h * head_dim:2 * C + (h + 1) * head_dim].astype(mxu_dtype)
        # contract last dims directly (no k.T relayout before the MXU push)
        s = lax.dot_general(q, k, (((1,), (1,)), ((), ())),
                            preferred_element_type=jnp.float32) * scale
        if kernel_size is not None:
            s = s + neg
        s = s - jnp.max(s, axis=-1, keepdims=True)
        p = jnp.exp(s)
        inv = pl.reciprocal(jnp.sum(p, axis=-1, keepdims=True), approx=approx_recip)
        o_h = jnp.dot(p.astype(mxu_dtype), v, preferred_element_type=jnp.float32) * inv
        acc_ref[:, h * head_dim:(h + 1) * head_dim] = o_h

    y = (res_ref[...]
         + jnp.dot(acc_ref[...].astype(mxu_dtype), wo_ref[...].astype(mxu_dtype),
                   preferred_element_type=jnp.float32)
         + bo_ref[...])
    o_ref[...] = _layernorm(y, g_ref[...], beta_ref[...])


def ffn_kernel(y_ref, w1_ref, b1_ref, w2_ref, b2_ref, g_ref, beta_ref, o_ref,
               *, mxu_dtype):
    """Fused FFN: LayerNorm(y + relu(y @ W1 + b1) @ W2 + b2).

    The 4C-wide intermediate lives only in vregs/VMEM — no HBM round-trip.
    """
    y = y_ref[...]
    h = jnp.dot(y.astype(mxu_dtype), w1_ref[...].astype(mxu_dtype),
                preferred_element_type=jnp.float32) + b1_ref[...]
    h = jnp.maximum(h, 0.0)
    z = y + jnp.dot(h.astype(mxu_dtype), w2_ref[...].astype(mxu_dtype),
                    preferred_element_type=jnp.float32) + b2_ref[...]
    o_ref[...] = _layernorm(z, g_ref[...], beta_ref[...])


def interp_blend_kernel(res_ref, x0_ref, x1_ref, w0_ref, w1_ref, o_ref):
    """Top-down pathway: res + w0 * x[i0] + w1 * x[i1]  (2-tap linear interp)."""
    o_ref[...] = (res_ref[...]
                  + w0_ref[...] * x0_ref[...]
                  + w1_ref[...] * x1_ref[...])


# --------------------------------------------------------------- pallas_call --

def lateral_proj(x2d, p, *, precise, row_tile=256):
    R, Cin = x2d.shape
    C = p["w"].shape[1]
    tm, g = _row_tile(R, row_tile)
    mxu = jnp.float32 if precise else jnp.bfloat16
    return pl.pallas_call(
        functools.partial(lateral_kernel, mxu_dtype=mxu),
        out_shape=jax.ShapeDtypeStruct((R, C), jnp.float32),
        grid=(g,),
        in_specs=[
            pl.BlockSpec((tm, Cin), lambda i: (i, 0)),
            pl.BlockSpec((Cin, C), lambda i: (0, 0)),      # resident weight
            pl.BlockSpec((1, C), lambda i: (0, 0)),
            pl.BlockSpec((1, C), lambda i: (0, 0)),
            pl.BlockSpec((1, C), lambda i: (0, 0)),
        ],
        out_specs=pl.BlockSpec((tm, C), lambda i: (i, 0)),
        compiler_params=_PARALLEL1,
    )(x2d, p["w"], p["b"], p["g"], p["beta"])


def linear(x2d, w, b, *, precise, row_tile=256):
    R, K = x2d.shape
    N = w.shape[1]
    tm, g = _row_tile(R, row_tile)
    mxu = jnp.float32 if precise else jnp.bfloat16
    return pl.pallas_call(
        functools.partial(linear_kernel, mxu_dtype=mxu),
        out_shape=jax.ShapeDtypeStruct((R, N), jnp.float32),
        grid=(g,),
        in_specs=[
            pl.BlockSpec((tm, K), lambda i: (i, 0)),
            pl.BlockSpec((K, N), lambda i: (0, 0)),
            pl.BlockSpec((1, N), lambda i: (0, 0)),
        ],
        out_specs=pl.BlockSpec((tm, N), lambda i: (i, 0)),
        compiler_params=_PARALLEL1,
    )(x2d, w, b)


def attn_outproj_ln(qkv, xb, p, *, B, T, num_heads, kernel_size, precise):
    C = xb.shape[1]
    dh = C // num_heads
    mxu = jnp.float32 if precise else jnp.bfloat16
    kern = functools.partial(
        attn_block_kernel, num_heads=num_heads, head_dim=dh,
        kernel_size=kernel_size, mxu_dtype=mxu, approx_recip=not precise)
    return pl.pallas_call(
        kern,
        out_shape=jax.ShapeDtypeStruct((B * T, C), jnp.float32),
        grid=(B,),
        in_specs=[
            pl.BlockSpec((T, 3 * C), lambda b: (b, 0)),    # qkv slab, this batch
            pl.BlockSpec((T, C), lambda b: (b, 0)),        # residual
            pl.BlockSpec((C, C), lambda b: (0, 0)),        # w_out resident
            pl.BlockSpec((1, C), lambda b: (0, 0)),
            pl.BlockSpec((1, C), lambda b: (0, 0)),
            pl.BlockSpec((1, C), lambda b: (0, 0)),
        ],
        out_specs=pl.BlockSpec((T, C), lambda b: (b, 0)),
        scratch_shapes=[pltpu.VMEM((T, C), jnp.float32)],  # per-block attn output
        input_output_aliases={1: 0},                       # write over the residual
        compiler_params=_PARALLEL1,
    )(qkv, xb, p["w_out"], p["b_out"], p["g1"], p["beta1"])


def ffn(y, p, *, precise, row_tile=256):
    R, C = y.shape
    Hf = p["w1"].shape[1]
    tm, g = _row_tile(R, row_tile)
    mxu = jnp.float32 if precise else jnp.bfloat16
    return pl.pallas_call(
        functools.partial(ffn_kernel, mxu_dtype=mxu),
        out_shape=jax.ShapeDtypeStruct((R, C), jnp.float32),
        grid=(g,),
        in_specs=[
            pl.BlockSpec((tm, C), lambda i: (i, 0)),
            pl.BlockSpec((C, Hf), lambda i: (0, 0)),
            pl.BlockSpec((1, Hf), lambda i: (0, 0)),
            pl.BlockSpec((Hf, C), lambda i: (0, 0)),
            pl.BlockSpec((1, C), lambda i: (0, 0)),
            pl.BlockSpec((1, C), lambda i: (0, 0)),
            pl.BlockSpec((1, C), lambda i: (0, 0)),
        ],
        out_specs=pl.BlockSpec((tm, C), lambda i: (i, 0)),
        input_output_aliases={0: 0},                       # write over y
        compiler_params=_PARALLEL1,
    )(y, p["w1"], p["b1"], p["w2"], p["b2"], p["g2"], p["beta2"])


def interp_add(coarse, fine, *, row_tile=512):
    """fine + F.interpolate(coarse, size=T_out, mode='linear', align_corners=False).

    2-tap gather (static indices, cheap XLA take) + tiled Pallas blend — replaces the
    dense (T_out, T_in) interpolation matmul.
    """
    T_in, B, C = coarse.shape
    T_out = fine.shape[0]
    scale = T_in / T_out
    dst = np.arange(T_out, dtype=np.float32)
    src = np.maximum(scale * (dst + 0.5) - 0.5, 0.0)
    i0 = np.minimum(np.floor(src).astype(np.int32), T_in - 1)
    i1 = np.minimum(i0 + 1, T_in - 1)
    w1 = (src - i0.astype(np.float32)).astype(np.float32)
    w0 = (1.0 - w1).astype(np.float32)

    xc = coarse.reshape(T_in, B * C)
    x0 = jnp.take(xc, jnp.asarray(i0), axis=0)             # (T_out, B*C)
    x1 = jnp.take(xc, jnp.asarray(i1), axis=0)
    res = fine.reshape(T_out, B * C)
    w0c = jnp.asarray(w0).reshape(T_out, 1)
    w1c = jnp.asarray(w1).reshape(T_out, 1)

    BC = B * C
    tm, g = _row_tile(T_out, row_tile)
    out = pl.pallas_call(
        interp_blend_kernel,
        out_shape=jax.ShapeDtypeStruct((T_out, BC), jnp.float32),
        grid=(g,),
        in_specs=[
            pl.BlockSpec((tm, BC), lambda i: (i, 0)),
            pl.BlockSpec((tm, BC), lambda i: (i, 0)),
            pl.BlockSpec((tm, BC), lambda i: (i, 0)),
            pl.BlockSpec((tm, 1), lambda i: (i, 0)),
            pl.BlockSpec((tm, 1), lambda i: (i, 0)),
        ],
        out_specs=pl.BlockSpec((tm, BC), lambda i: (i, 0)),
        input_output_aliases={0: 0},                       # in-place over the residual
        compiler_params=_PARALLEL1,
    )(res, x0, x1, w0c, w1c)
    return out.reshape(T_out, B, C)


# -------------------------------------------------------------------- glue ---

def transformer_layer(x, p, num_heads, kernel_size, *, precise):
    """torch.nn.TransformerEncoderLayer (post-norm, relu, eval) on (T, B, C)."""
    T, B, C = x.shape
    # One batch-major relayout in, one out — replaces the 3C-wide qkv transpose and
    # the attention-output transpose of the naive formulation.
    xb = jnp.transpose(x, (1, 0, 2)).reshape(B * T, C)
    qkv = linear(xb, p["w_in"], p["b_in"], precise=precise)            # (B*T, 3C)
    y = attn_outproj_ln(qkv, xb, p, B=B, T=T, num_heads=num_heads,
                        kernel_size=kernel_size, precise=precise)      # (B*T, C)
    z = ffn(y, p, precise=precise)                                     # (B*T, C)
    return jnp.transpose(z.reshape(B, T, C), (1, 0, 2))


def self_attn_fpn(inps, params, num_heads, kernel_size=None, *, precise=False):
    """inps: list of (T_i, B, Cin_i) arrays, order 'tbc'.  Returns 'tbc' outputs."""
    C = params["lateral"][0]["w"].shape[1]
    laterals = []
    for x, p in zip(inps, params["lateral"]):
        T, B, Cin = x.shape
        y = lateral_proj(x.reshape(T * B, Cin), p, precise=precise)
        laterals.append(y.reshape(T, B, C))

    for i in range(len(laterals) - 1, 0, -1):
        laterals[i - 1] = interp_add(laterals[i], laterals[i - 1])

    return [transformer_layer(lat, p, num_heads, kernel_size, precise=precise)
            for lat, p in zip(laterals, params["trans"])]


# -------------------------------------------------------------- parameters ---

def init_params(key, in_channels, out_channels):
    C = out_channels
    params = {"lateral": [], "trans": []}
    for cin in in_channels:
        key, k1, k2 = jax.random.split(key, 3)
        params["lateral"].append({
            "w": jax.random.normal(k1, (cin, C), jnp.float32) * 0.1,
            "b": jax.random.normal(k2, (1, C), jnp.float32) * 0.02,
            "g": jnp.ones((1, C), jnp.float32),
            "beta": jnp.zeros((1, C), jnp.float32),
        })
    for _ in in_channels:
        key, *ks = jax.random.split(key, 7)
        params["trans"].append({
            "w_in": jax.random.normal(ks[0], (C, 3 * C), jnp.float32) * 0.1,
            "b_in": jax.random.normal(ks[1], (1, 3 * C), jnp.float32) * 0.02,
            "w_out": jax.random.normal(ks[2], (C, C), jnp.float32) * 0.1,
            "b_out": jax.random.normal(ks[3], (1, C), jnp.float32) * 0.02,
            "g1": jnp.ones((1, C), jnp.float32),
            "beta1": jnp.zeros((1, C), jnp.float32),
            "w1": jax.random.normal(ks[4], (C, 4 * C), jnp.float32) * 0.1,
            "b1": jnp.zeros((1, 4 * C), jnp.float32),
            "w2": jax.random.normal(ks[5], (4 * C, C), jnp.float32) * 0.1,
            "b2": jnp.zeros((1, C), jnp.float32),
            "g2": jnp.ones((1, C), jnp.float32),
            "beta2": jnp.zeros((1, C), jnp.float32),
        })
    return params


# --------------------------------------------------------- pure-JAX reference -

def compute_mask_ref(n, kernel_size):
    if kernel_size is None:
        return jnp.zeros((n, n), jnp.float32)
    half = kernel_size // 2
    i = jnp.arange(n)[:, None]
    j = jnp.arange(n)[None, :]
    keep = (j >= i - half) & (j <= i + half)
    return jnp.where(keep, 0.0, -1e9).astype(jnp.float32)


def interp_matrix_ref(t_in, t_out):
    scale = t_in / t_out
    dst = jnp.arange(t_out, dtype=jnp.float32)
    src = jnp.maximum(scale * (dst + 0.5) - 0.5, 0.0)
    i0 = jnp.minimum(jnp.floor(src).astype(jnp.int32), t_in - 1)
    i1 = jnp.minimum(i0 + 1, t_in - 1)
    w1 = src - i0.astype(jnp.float32)
    w0 = 1.0 - w1
    oh0 = jax.nn.one_hot(i0, t_in, dtype=jnp.float32)
    oh1 = jax.nn.one_hot(i1, t_in, dtype=jnp.float32)
    return w0[:, None] * oh0 + w1[:, None] * oh1


def ref_forward(inps, params, num_heads, kernel_size=None):
    def ln(y, g, b, eps=1e-5):
        mu = y.mean(-1, keepdims=True)
        var = ((y - mu) ** 2).mean(-1, keepdims=True)
        return (y - mu) / jnp.sqrt(var + eps) * g + b

    C = params["lateral"][0]["w"].shape[1]
    laterals = []
    for x, p in zip(inps, params["lateral"]):
        y = jnp.maximum(ln(x @ p["w"] + p["b"][0], p["g"][0], p["beta"][0]), 0.0)
        laterals.append(y)
    for i in range(len(laterals) - 1, 0, -1):
        wi = interp_matrix_ref(laterals[i].shape[0], laterals[i - 1].shape[0])
        laterals[i - 1] = laterals[i - 1] + jnp.einsum("ts,sbc->tbc", wi, laterals[i])
    outs = []
    for x, p in zip(laterals, params["trans"]):
        T, B, _ = x.shape
        H, dh = num_heads, C // num_heads
        qkv = x @ p["w_in"] + p["b_in"][0]
        q, k, v = jnp.split(qkv, 3, axis=-1)
        heads = lambda a: a.reshape(T, B, H, dh).transpose(1, 2, 0, 3)
        q, k, v = heads(q), heads(k), heads(v)
        s = (jnp.einsum("bhtd,bhsd->bhts", q, k) / math.sqrt(dh)
             + compute_mask_ref(T, kernel_size))
        pa = jax.nn.softmax(s, axis=-1)
        o = jnp.einsum("bhts,bhsd->bhtd", pa, v).transpose(2, 0, 1, 3).reshape(T, B, C)
        y = ln(x + o @ p["w_out"] + p["b_out"][0], p["g1"][0], p["beta1"][0])
        h = jnp.maximum(y @ p["w1"] + p["b1"][0], 0.0)
        z = ln(y + h @ p["w2"] + p["b2"][0], p["g2"][0], p["beta2"][0])
        outs.append(z)
    return outs


# -------------------------------------------------------------------- main ---

if __name__ == "__main__":
    key = jax.random.PRNGKey(0)
    in_channels = (4, 8)      # two FPN levels
    out_channels = 32
    num_heads = 8
    batch = 2
    seq_lens = (16, 8)        # level-1 is coarser, upsampled onto level-0

    kp, kx0, kx1 = jax.random.split(key, 3)
    inps = [jax.random.normal(k, (t, batch, c), jnp.float32)
            for k, t, c in zip((kx0, kx1), seq_lens, in_channels)]
    params = init_params(kp, in_channels, out_channels)

    # 1) precise path (f32 MXU inputs, exact reciprocal), global attention
    outs = jax.block_until_ready(
        self_attn_fpn(inps, params, num_heads, kernel_size=None, precise=True))
    refs = ref_forward(inps, params, num_heads, kernel_size=None)
    for o, r in zip(outs, refs):
        assert o.shape == r.shape, (o.shape, r.shape)
        err = float(jnp.max(jnp.abs(o - r)))
        assert err < 2e-2, f"precise path max abs err {err}"

    # 2) fast path (bf16 MXU inputs, approx reciprocal), global attention
    outs_fast = jax.block_until_ready(
        self_attn_fpn(inps, params, num_heads, kernel_size=None, precise=False))
    for o, r in zip(outs_fast, refs):
        err = float(jnp.max(jnp.abs(o - r)))
        assert err < 1e-1, f"bf16 path max abs err {err}"

    # 3) fast path with a local-attention band mask built in-kernel (kernel_size=5)
    outs_mask = jax.block_until_ready(
        self_attn_fpn(inps, params, num_heads, kernel_size=5, precise=False))
    refs_mask = ref_forward(inps, params, num_heads, kernel_size=5)
    for o, r in zip(outs_mask, refs_mask):
        err = float(jnp.max(jnp.abs(o - r)))
        assert err < 1e-1, f"masked bf16 path max abs err {err}"

    print("KERNEL_OK")
</pallas_src>

<mosaic_0001>
module attributes {stable_mosaic.version = 11 : i64} {
  func.func @lateral_kernel(%arg0: i32, %arg1: memref<32x4xf32, #tpu.memory_space<vmem>>, %arg2: memref<4x32xf32, #tpu.memory_space<vmem>>, %arg3: memref<1x32xf32, #tpu.memory_space<vmem>>, %arg4: memref<1x32xf32, #tpu.memory_space<vmem>>, %arg5: memref<1x32xf32, #tpu.memory_space<vmem>>, %arg6: memref<32x32xf32, #tpu.memory_space<vmem>>) attributes {dimension_semantics = [#tpu.dimension_semantics<parallel>], iteration_bounds = array<i64: 1>, scalar_prefetch = 0 : i64, scratch_operands = 0 : i64, tpu.core_type = #tpu.core_type<tc>, window_params = [{transform_indices = @transform_0, window_bounds = array<i64: 32, 4>}, {pipeline_mode = #tpu.pipeline_mode<synchronous>, transform_indices = @transform_1, window_bounds = array<i64: 4, 32>}, {pipeline_mode = #tpu.pipeline_mode<synchronous>, transform_indices = @transform_2, window_bounds = array<i64: 1, 32>}, {pipeline_mode = #tpu.pipeline_mode<synchronous>, transform_indices = @transform_3, window_bounds = array<i64: 1, 32>}, {pipeline_mode = #tpu.pipeline_mode<synchronous>, transform_indices = @transform_4, window_bounds = array<i64: 1, 32>}, {transform_indices = @transform_5, window_bounds = array<i64: 32, 32>}]} {
    %c0 = arith.constant 0 : index
    %c0_0 = arith.constant 0 : index
    %0 = vector.load %arg1[%c0, %c0_0] : memref<32x4xf32, #tpu.memory_space<vmem>>, vector<32x4xf32>
    %c0_1 = arith.constant 0 : index
    %c0_2 = arith.constant 0 : index
    %1 = vector.load %arg2[%c0_1, %c0_2] : memref<4x32xf32, #tpu.memory_space<vmem>>, vector<4x32xf32>
    %cst = arith.constant dense<0.000000e+00> : vector<32x32xf32>
    %2 = tpu.matmul %0, %1, %cst {dimension_numbers = #tpu.dot_dimension_numbers<[1], [0], [0], [1], [0, 0, 1, 1], [], []>} : vector<32x4xf32>, vector<4x32xf32>, vector<32x32xf32> -> vector<32x32xf32>
    %c0_3 = arith.constant 0 : index
    %c0_4 = arith.constant 0 : index
    %3 = vector.load %arg3[%c0_3, %c0_4] : memref<1x32xf32, #tpu.memory_space<vmem>>, vector<1x32xf32>
    %4 = vector.broadcast %3 : vector<1x32xf32> to vector<32x32xf32>
    %5 = arith.addf %2, %4 : vector<32x32xf32>
    %c0_5 = arith.constant 0 : index
    %c0_6 = arith.constant 0 : index
    %6 = vector.load %arg4[%c0_5, %c0_6] : memref<1x32xf32, #tpu.memory_space<vmem>>, vector<1x32xf32>
    %c0_7 = arith.constant 0 : index
    %c0_8 = arith.constant 0 : index
    %7 = vector.load %arg5[%c0_7, %c0_8] : memref<1x32xf32, #tpu.memory_space<vmem>>, vector<1x32xf32>
    %cst_9 = arith.constant dense<0.000000e+00> : vector<32xf32>
    %8 = vector.multi_reduction <add>, %5, %cst_9 [1] : vector<32x32xf32> to vector<32xf32>
    %9 = vector.shape_cast %8 : vector<32xf32> to vector<32x1xf32>
    %cst_10 = arith.constant 3.200000e+01 : f32
    %10 = vector.broadcast %cst_10 : f32 to vector<32x1xf32>
    %11 = arith.divf %9, %10 : vector<32x1xf32>
    %12 = vector.broadcast %11 : vector<32x1xf32> to vector<32x32xf32>
    %13 = arith.subf %5, %12 : vector<32x32xf32>
    %14 = arith.mulf %13, %13 : vector<32x32xf32>
    %cst_11 = arith.constant dense<0.000000e+00> : vector<32xf32>
    %15 = vector.multi_reduction <add>, %14, %cst_11 [1] : vector<32x32xf32> to vector<32xf32>
    %16 = vector.shape_cast %15 : vector<32xf32> to vector<32x1xf32>
    %cst_12 = arith.constant 3.200000e+01 : f32
    %17 = vector.broadcast %cst_12 : f32 to vector<32x1xf32>
    %18 = arith.divf %16, %17 : vector<32x1xf32>
    %19 = vector.broadcast %11 : vector<32x1xf32> to vector<32x32xf32>
    %20 = arith.subf %5, %19 : vector<32x32xf32>
    %cst_13 = arith.constant 9.99999974E-6 : f32
    %21 = vector.broadcast %cst_13 : f32 to vector<32x1xf32>
    %22 = arith.addf %18, %21 : vector<32x1xf32>
    %23 = math.rsqrt %22 : vector<32x1xf32>
    %24 = vector.broadcast %23 : vector<32x1xf32> to vector<32x32xf32>
    %25 = arith.mulf %20, %24 : vector<32x32xf32>
    %26 = vector.broadcast %6 : vector<1x32xf32> to vector<32x32xf32>
    %27 = arith.mulf %25, %26 : vector<32x32xf32>
    %28 = vector.broadcast %7 : vector<1x32xf32> to vector<32x32xf32>
    %29 = arith.addf %27, %28 : vector<32x32xf32>
    %cst_14 = arith.constant 0.000000e+00 : f32
    %30 = vector.broadcast %cst_14 : f32 to vector<32x32xf32>
    %31 = arith.maximumf %29, %30 : vector<32x32xf32>
    %c0_15 = arith.constant 0 : index
    %c0_16 = arith.constant 0 : index
    %32 = vector.load %arg6[%c0_15, %c0_16] : memref<32x32xf32, #tpu.memory_space<vmem>>, vector<32x32xf32>
    tpu.vector_store %arg6[%c0_15, %c0_16], %31 {strides = array<i32>} : memref<32x32xf32, #tpu.memory_space<vmem>>, vector<32x32xf32>,
    return
  }
  func.func @transform_0(%arg0: i32) -> (i32, i32) {
    %c0_i32 = arith.constant 0 : i32
    %c0_i32_0 = arith.constant 0 : i32
    return %arg0, %c0_i32 : i32, i32
  }
  func.func @transform_1(%arg0: i32) -> (i32, i32) {
    %c0_i32 = arith.constant 0 : i32
    %c0_i32_0 = arith.constant 0 : i32
    %c0_i32_1 = arith.constant 0 : i32
    return %c0_i32, %c0_i32_0 : i32, i32
  }
  func.func @transform_2(%arg0: i32) -> (i32, i32) {
    %c0_i32 = arith.constant 0 : i32
    %c0_i32_0 = arith.constant 0 : i32
    %c0_i32_1 = arith.constant 0 : i32
    return %c0_i32, %c0_i32_0 : i32, i32
  }
  func.func @transform_3(%arg0: i32) -> (i32, i32) {
    %c0_i32 = arith.constant 0 : i32
    %c0_i32_0 = arith.constant 0 : i32
    %c0_i32_1 = arith.constant 0 : i32
    return %c0_i32, %c0_i32_0 : i32, i32
  }
  func.func @transform_4(%arg0: i32) -> (i32, i32) {
    %c0_i32 = arith.constant 0 : i32
    %c0_i32_0 = arith.constant 0 : i32
    %c0_i32_1 = arith.constant 0 : i32
    return %c0_i32, %c0_i32_0 : i32, i32
  }
  func.func @transform_5(%arg0: i32) -> (i32, i32) {
    %c0_i32 = arith.constant 0 : i32
    %c0_i32_0 = arith.constant 0 : i32
    return %arg0, %c0_i32 : i32, i32
  }
}

</mosaic_0001>

<llo_original>
// kernel: tpu_custom_call.1
$region0: #{tpu_custom_call.1}
  #allocation0 [shape = 'u32[]', space=smem, size = 0x4, offset = 0x4, fixed_abs, tag = 'smem constant byte address 0x4 - core index']
  #allocation1 [shape = 'u32[144,128]{1,0:T(1,128)}', space=vmem, size = 0x12000, scoped, tag = 'internal scratch']
  %s0 = inlined_call_operand.vmem [shape: f32[32,4], index: 0, kind: input, shape index: {}]
  %s1 = inlined_call_operand.vmem [shape: f32[4,32], index: 1, kind: input, shape index: {}]
  %s2 = inlined_call_operand.vmem [shape: f32[1,32], index: 2, kind: input, shape index: {}]
  %s3 = inlined_call_operand.vmem [shape: f32[1,32], index: 3, kind: input, shape index: {}]
  %s4 = inlined_call_operand.vmem [shape: f32[1,32], index: 4, kind: input, shape index: {}]
  %s5 = inlined_call_operand.hbm [shape: f32[32,32], index: 5, kind: output, shape index: {}]
  %s6 = sld [smem:[#allocation0]]
  $region30: #{tpu_custom_call.1} parent=0
    _
  %s8 = ssub.s32 1, %s6
  %s9 = scalar_select 0, %s8, %s6
  $region1: #{tpu_custom_call.1} parent=0
    #allocation2 [shape = 'u8[16384]{0}', space=vmem, size = 0x4000, scoped, tag = 'output window, operand 0, single buffered']
    #allocation3 [shape = 's32[1]{0}', space=sflag, size = 0x4, scoped, tag = 'scoped memory for tpu_custom_call.1']
    %10 = vsyncpa [#allocation3], 0
    // Predicated region
    $region2: #{tpu_custom_call.1} parent=1 // pred_check
      _
    $region3: #{tpu_custom_call.1} parent=1 // pred_check_branch
      %12 = sbr.rel (0) target = $region5
    $region4: #{tpu_custom_call.1} parent=1 // pred_region
      _
    $region5: #{tpu_custom_call.1} parent=1 // pred_fallthru
      _
    // Predicated region
    $region6: #{tpu_custom_call.1} parent=1 // pred_check
      _
    $region7: #{tpu_custom_call.1} parent=1 // pred_check_branch
      %14 = sbr.rel (0) target = $region9
    $region8: #{tpu_custom_call.1} parent=1 // pred_region
      _
    $region9: #{tpu_custom_call.1} parent=1 // pred_fallthru
      _
    // Predicated region
    $region10: #{tpu_custom_call.1} parent=1 // pred_check
      _
    $region11: #{tpu_custom_call.1} parent=1 // pred_check_branch
      %16 = sbr.rel (0) target = $region13
    $region12: #{tpu_custom_call.1} parent=1 // pred_region
      _
    $region13: #{tpu_custom_call.1} parent=1 // pred_fallthru
      _
    // Predicated region
    $region14: #{tpu_custom_call.1} parent=1 // pred_check
      _
    $region15: #{tpu_custom_call.1} parent=1 // pred_check_branch
      %18 = sbr.rel (0) target = $region17
    $region16: #{tpu_custom_call.1} parent=1 // pred_region
      _
    $region17: #{tpu_custom_call.1} parent=1 // pred_fallthru
      _
    // Predicated region
    $region18: #{tpu_custom_call.1} parent=1 // pred_check
      _
    $region19: #{tpu_custom_call.1} parent=1 // pred_check_branch
      %20 = sbr.rel (0) target = $region21
    $region20: #{tpu_custom_call.1} parent=1 // pred_region
      _
    $region21: #{tpu_custom_call.1} parent=1 // pred_fallthru
      _
    %v21 = vld [vmem:[%s0] sm:$0xff]
    %v22 = vld [vmem:[%s0 + $0x8] sm:$0xff]
    %v23 = vld [vmem:[%s0 + $0x10] sm:$0xff]
    %v24 = vld [vmem:[%s0 + $0x18] sm:$0xff]
    %v25 = vld [vmem:[%s1] sm:$0xf]
    %v26 = vld [vmem:[%s2] sm:$0x1]
    %v28 = vlaneseq
    %v29 = vshrl.u32 %v28, 7
    %v30 = vsub.s32 0, %v29
    %v31 = vrot.slane %v26, %v30
    %vm33 = vcmask 31744
    %v35 = vsel %vm33, %v21, 0
    %v38 = vsel %vm33, %v22, 0
    %v41 = vsel %vm33, %v23, 0
    %v44 = vsel %vm33, %v24, 0
    %vm46 = vcmask 1043456
    %v48 = vsel %vm46, %v25, 0
    %50 = vmatprep.subr.mxu0 0.0
    %51 = vmatpush1.msra.mxu0 0.0
    %52 = vmatprep.subr.mxu0 0.0
    %53 = vmatpush1.msra.mxu0 0.0
    %54 = vmatprep.subr.mxu0 0.0
    %55 = vmatpush1.msra.mxu0 0.0
    %56 = vmatprep.subr.mxu0 0.0
    %57 = vmatpush1.msra.mxu0 0.0
    %58 = vmatprep.subr.mxu0 0.0
    %59 = vmatpush1.msra.mxu0 0.0
    %60 = vmatprep.subr.mxu0 0.0
    %61 = vmatpush1.msra.mxu0 0.0
    %62 = vmatprep.subr.mxu0 0.0
    %63 = vmatpush1.msra.mxu0 0.0
    %64 = vmatprep.subr.mxu0 0.0
    %65 = vmatpush1.msra.mxu0 0.0
    %66 = vmatprep.subr.mxu0 0.0
    %67 = vmatpush1.msra.mxu0 0.0
    %68 = vmatprep.subr.mxu0 0.0
    %69 = vmatpush1.msra.mxu0 0.0
    %70 = vmatprep.subr.mxu0 0.0
    %71 = vmatpush1.msra.mxu0 0.0
    %72 = vmatprep.subr.mxu0 0.0
    %73 = vmatpush1.msra.mxu0 0.0
    %74 = vmatprep.subr.mxu0 0.0
    %75 = vmatpush1.msra.mxu0 0.0
    %76 = vmatprep.subr.mxu0 0.0
    %77 = vmatpush1.msra.mxu0 0.0
    %78 = vmatprep.subr.mxu0 0.0
    %79 = vmatpush1.msra.mxu0 0.0
    %80 = vmatprep.subr.mxu0 0.0
    %81 = vmatpush1.msra.mxu0 %v48
    %82 = vmatprep.subr.mxu0 0.0
    %83 = vmatpush2.msra.mxu0 0.0
    %84 = vmatprep.subr.mxu0 0.0
    %85 = vmatpush2.msra.mxu0 0.0
    %86 = vmatprep.subr.mxu0 0.0
    %87 = vmatpush2.msra.mxu0 0.0
    %88 = vmatprep.subr.mxu0 0.0
    %89 = vmatpush2.msra.mxu0 0.0
    %90 = vmatprep.subr.mxu0 0.0
    %91 = vmatpush2.msra.mxu0 0.0
    %92 = vmatprep.subr.mxu0 0.0
    %93 = vmatpush2.msra.mxu0 0.0
    %94 = vmatprep.subr.mxu0 0.0
    %95 = vmatpush2.msra.mxu0 0.0
    %96 = vmatprep.subr.mxu0 0.0
    %97 = vmatpush2.msra.mxu0 0.0
    %98 = vmatprep.subr.mxu0 0.0
    %99 = vmatpush2.msra.mxu0 0.0
    %100 = vmatprep.subr.mxu0 0.0
    %101 = vmatpush2.msra.mxu0 0.0
    %102 = vmatprep.subr.mxu0 0.0
    %103 = vmatpush2.msra.mxu0 0.0
    %104 = vmatprep.subr.mxu0 0.0
    %105 = vmatpush2.msra.mxu0 0.0
    %106 = vmatprep.subr.mxu0 0.0
    %107 = vmatpush2.msra.mxu0 0.0
    %108 = vmatprep.subr.mxu0 0.0
    %109 = vmatpush2.msra.mxu0 0.0
    %110 = vmatprep.subr.mxu0 0.0
    %111 = vmatpush2.msra.mxu0 0.0
    %112 = vmatprep.subr.mxu0 0.0
    %113 = vmatpush2.msra.mxu0 0.0
    %114 = vmatprep.mubr.f32.mxu0 0.0
    %115 = vmatmul.mubr.f32.gmra.mxu0 %v35
    %v116 = vpop.f32.mrf.mxu0
    %v117 = vadd.f32 %v31, %v116
    %v118 = vpop.f32.mrf.mxu0
    %119 = vmatprep.mubr.f32.mxu0 0.0
    %120 = vmatmul.mubr.f32.gmra.mxu0 %v38
    %v121 = vpop.f32.mrf.mxu0
    %v122 = vadd.f32 %v31, %v121
    %v123 = vpop.f32.mrf.mxu0
    %124 = vmatprep.mubr.f32.mxu0 0.0
    %125 = vmatmul.mubr.f32.gmra.mxu0 %v41
    %v126 = vpop.f32.mrf.mxu0
    %v127 = vadd.f32 %v31, %v126
    %v128 = vpop.f32.mrf.mxu0
    %129 = vmatprep.mubr.f32.mxu0 0.0
    %130 = vmatmul.mubr.f32.gmra.mxu0 %v44
    %v131 = vpop.f32.mrf.mxu0
    %v132 = vadd.f32 %v31, %v131
    %v133 = vpop.f32.mrf.mxu0
    %134 = vdwg.mxu0
    %v135 = vld [vmem:[%s3] sm:$0x1]
    %v136 = vld [vmem:[%s4] sm:$0x1]
    %vm137 = vcmask 261120
    %v138 = vsel %vm137, %v117, 0.0
    %139 = vadd.xlane.f32.xlu0 %v138
    %v140 = vpop.xlane.xlu0 %139
    %v141 = vsel %vm137, %v122, 0.0
    %142 = vadd.xlane.f32.xlu0 %v141
    %v143 = vpop.xlane.xlu0 %142
    %v144 = vsel %vm137, %v127, 0.0
    %145 = vadd.xlane.f32.xlu0 %v144
    %v146 = vpop.xlane.xlu0 %145
    %v147 = vsel %vm137, %v132, 0.0
    %148 = vadd.xlane.f32.xlu0 %v147
    %v149 = vpop.xlane.xlu0 %148
    %v150 = vrcp.pop 32.0
    %v151 = vmul.f32 %v140, %v150
    %v152 = vmul.f32 %v143, %v150
    %v153 = vmul.f32 %v146, %v150
    %v154 = vmul.f32 %v149, %v150
    %v155 = vsub.f32 %v117, %v151
    %v156 = vsub.f32 %v122, %v152
    %v157 = vsub.f32 %v127, %v153
    %v158 = vsub.f32 %v132, %v154
    %v159 = vmul.f32 %v155, %v155
    %v160 = vmul.f32 %v156, %v156
    %v161 = vmul.f32 %v157, %v157
    %v162 = vmul.f32 %v158, %v158
    %v163 = vsel %vm137, %v159, 0.0
    %164 = vadd.xlane.f32.xlu0 %v163
    %v165 = vpop.xlane.xlu0 %164
    %v166 = vsel %vm137, %v160, 0.0
    %167 = vadd.xlane.f32.xlu0 %v166
    %v168 = vpop.xlane.xlu0 %167
    %v169 = vsel %vm137, %v161, 0.0
    %170 = vadd.xlane.f32.xlu0 %v169
    %v171 = vpop.xlane.xlu0 %170
    %v172 = vsel %vm137, %v162, 0.0
    %173 = vadd.xlane.f32.xlu0 %v172
    %v174 = vpop.xlane.xlu0 %173
    %v175 = vmul.f32 %v165, %v150
    %v176 = vmul.f32 %v168, %v150
    %v177 = vmul.f32 %v171, %v150
    %v178 = vmul.f32 %v174, %v150
    %v179 = vadd.f32 %v175, 1e-05
    %v180 = vadd.f32 %v176, 1e-05
    %v181 = vadd.f32 %v177, 1e-05
    %v182 = vadd.f32 %v178, 1e-05
    %v183 = vrsqrt.pop %v179
    %v184 = vrsqrt.pop %v180
    %v185 = vrsqrt.pop %v181
    %v186 = vrsqrt.pop %v182
    %v187 = vmul.f32 %v155, %v183
    %v188 = vmul.f32 %v156, %v184
    %v189 = vmul.f32 %v157, %v185
    %v190 = vmul.f32 %v158, %v186
    %v192 = vlaneseq
    %v193 = vshrl.u32 %v192, 7
    %v194 = vsub.s32 0, %v193
    %v195 = vrot.slane %v135, %v194
    %v197 = vmul.f32 %v187, %v195
    %v198 = vmul.f32 %v188, %v195
    %v199 = vmul.f32 %v189, %v195
    %v200 = vmul.f32 %v190, %v195
    %v202 = vlaneseq
    %v203 = vshrl.u32 %v202, 7
    %v204 = vsub.s32 0, %v203
    %v205 = vrot.slane %v136, %v204
    %v207 = vadd.f32 %v197, %v205
    %v208 = vadd.f32 %v198, %v205
    %v209 = vadd.f32 %v199, %v205
    %v210 = vadd.f32 %v200, %v205
    %v211 = vmax.f32 %v207, 0.0
    %v212 = vmax.f32 %v208, 0.0
    %v213 = vmax.f32 %v209, 0.0
    %v214 = vmax.f32 %v210, 0.0
    %215 = vst.msk [vmem:[#allocation2] sm:$0xff] %vm137, %v211
    %216 = vst.msk [vmem:[#allocation2 + $0x8] sm:$0xff] %vm137, %v212
    %217 = vst.msk [vmem:[#allocation2 + $0x10] sm:$0xff] %vm137, %v213
    %218 = vst.msk [vmem:[#allocation2 + $0x18] sm:$0xff] %vm137, %v214
    // Predicated region
    $region22: #{tpu_custom_call.1} parent=1 // pred_check
      _
    $region23: #{tpu_custom_call.1} parent=1 // pred_check_branch
      %220 = sbr.rel (0) target = $region25
    $region24: #{tpu_custom_call.1} parent=1 // pred_region
      %s222 = ssub.s32 512, 512
      %223 = vsyncadd [#allocation3], %s222
      %s224 = sshll.u32 [#allocation2], 4
      %s225 = int_to_ptr.vmem [resolvable:$true] %s224
      %230 = dma.vmem_to_hbm [thread:$0]  %s225, 512, %s5, [#allocation3], 128, 128, 8
    $region25: #{tpu_custom_call.1} parent=1 // pred_fallthru
      _
    // Predicated region
    $region26: #{tpu_custom_call.1} parent=1 // pred_check
      _
    $region27: #{tpu_custom_call.1} parent=1 // pred_check_branch
      %232 = sbr.rel (0) target = $region29
    $region28: #{tpu_custom_call.1} parent=1 // pred_region
      %233 = dma.done [#allocation3], 512
    $region29: #{tpu_custom_call.1} parent=1 // pred_fallthru
      _
    %234 = vsyncpa [#allocation3], 1

</llo_original>
